<compile_context>
chip_gen: v7x
topology: tpu7x:2x2x1
jax: 0.10.0
libtpu: 0.0.40
codegen_flags: <defaults>
</compile_context>

<pallas_src>
import functools

import jax
import jax.numpy as jnp
from jax import lax
from jax.experimental import pallas as pl
from jax.experimental.pallas import tpu as pltpu


def _self_attention_kernel(x_ref, w_ref, b_ref, out_ref, attn_ref,
                           *, seq_len, batch_tile, fp):
    """One batch-block per grid step.

    x_ref:    (batch_tile*seq_len, F)       flattened rows of x
    w_ref:    (F, 3*fp)                     fused [Wq*scale | Wk | Wv] (padded)
    b_ref:    (1, 3*fp)                     fused [bq*scale | bk | bv] (padded)
    out_ref:  (batch_tile*seq_len, fp)      attention output (feature-padded)
    attn_ref: (batch_tile*seq_len, seq_len) attention weights
    """
    x = x_ref[...]                                               # (bt*S, F)

    # Fused QKV projection: one wide MXU matmul, M = bt*S, N = 3*fp.
    qkv = jnp.dot(x, w_ref[...], preferred_element_type=jnp.float32) + b_ref[...]

    # fp is a multiple of 128 -> these lane slices are tile-aligned.
    q = qkv[:, 0 * fp:1 * fp]
    k = qkv[:, 1 * fp:2 * fp]
    v = qkv[:, 2 * fp:3 * fp]

    # Attention is per batch element; batch_tile is small and static, so the
    # Python loop unrolls into a short sequence of tiny matmuls.
    for b in range(batch_tile):
        lo = b * seq_len
        hi = lo + seq_len
        qb = q[lo:hi, :]
        kb = k[lo:hi, :]
        vb = v[lo:hi, :]

        # scores = qb @ kb^T without an explicit transpose: contract last dims.
        scores = lax.dot_general(qb, kb, (((1,), (1,)), ((), ())),
                                 preferred_element_type=jnp.float32)   # (S, S)

        # Numerically stable softmax over the last dim.
        # Exact normalisation: attention weights are a module output and must
        # sum to 1 per row (approximate EUP reciprocal is not accurate enough).
        m = jnp.max(scores, axis=-1, keepdims=True)
        e = jnp.exp(scores - m)
        denom = jnp.sum(e, axis=-1, keepdims=True)
        attn = e * (1.0 / denom)                                       # (S, S)

        out_ref[lo:hi, :] = jnp.dot(attn, vb,
                                    preferred_element_type=jnp.float32)
        attn_ref[lo:hi, :] = attn


def _pack_qkv(wq, bq, wk, bk, wv, bv, feature_size):
    """Fuse Q/K/V weights into one (F, 3*Fp) matrix with the softmax scale
    folded into the query branch and each branch zero-padded to Fp (multiple
    of 128) columns so kernel slices and output stores are lane-dense."""
    f = feature_size
    fp = max(128, ((f + 127) // 128) * 128)
    scale = 1.0 / jnp.sqrt(jnp.float32(f))

    def pad_w(w):   # (F, F) -> (F, Fp)
        return jnp.pad(w, ((0, 0), (0, fp - f)))

    def pad_b(b):   # (1, F) -> (1, Fp)
        return jnp.pad(b, ((0, 0), (0, fp - f)))

    wqkv = jnp.concatenate([pad_w(wq * scale), pad_w(wk), pad_w(wv)], axis=1)
    bqkv = jnp.concatenate([pad_b(bq * scale), pad_b(bk), pad_b(bv)], axis=1)
    return wqkv, bqkv, fp


def self_attention_layer(x, wq, bq, wk, bk, wv, bv, *, max_rows=256):
    """x: (B, S, F) f32.  wq/wk/wv: (F, F) already transposed for x @ W.
    bq/bk/bv: (1, F).  Returns (output (B,S,F), attention_weights (B,S,S))."""
    B, S, F = x.shape
    wqkv, bqkv, Fp = _pack_qkv(wq, bq, wk, bk, wv, bv, F)

    # Pick the largest batch tile whose row count (bt*S) stays <= max_rows so
    # the projection matmul feeds the MXU with a decent M, while keeping the
    # block sublane count a multiple of 8 when the grid has >1 step.
    bt = 1
    for d in range(1, B + 1):
        if B % d != 0:
            continue
        if d * S > max(max_rows, S):
            continue
        if d != B and (d * S) % 8 != 0:
            continue
        bt = d
    grid = (B // bt,)
    rows = bt * S

    x2 = x.reshape(B * S, F)

    kernel = functools.partial(_self_attention_kernel,
                               seq_len=S, batch_tile=bt, fp=Fp)

    out_shapes = (
        jax.ShapeDtypeStruct((B * S, Fp), jnp.float32),   # output (padded F)
        jax.ShapeDtypeStruct((B * S, S), jnp.float32),    # attention weights
    )

    out2, attn2 = pl.pallas_call(
        kernel,
        out_shape=out_shapes,
        grid_spec=pltpu.PrefetchScalarGridSpec(
            num_scalar_prefetch=0,
            grid=grid,
            in_specs=[
                pl.BlockSpec((rows, F), lambda i: (i, 0)),       # x rows
                pl.BlockSpec((F, 3 * Fp), lambda i: (0, 0)),     # fused W
                pl.BlockSpec((1, 3 * Fp), lambda i: (0, 0)),     # fused bias
            ],
            out_specs=[
                pl.BlockSpec((rows, Fp), lambda i: (i, 0)),      # output
                pl.BlockSpec((rows, S), lambda i: (i, 0)),       # attn weights
            ],
        ),
        compiler_params=pltpu.CompilerParams(
            dimension_semantics=("parallel",)),
    )(x2, wqkv, bqkv)

    out = out2[:, :F].reshape(B, S, F)
    attn = attn2.reshape(B, S, S)
    return out, attn


def _reference(x, wq, bq, wk, bk, wv, bv):
    q = x @ wq + bq
    k = x @ wk + bk
    v = x @ wv + bv
    scores = jnp.einsum("bqf,bkf->bqk", q, k) / jnp.sqrt(jnp.float32(x.shape[-1]))
    attn = jax.nn.softmax(scores, axis=-1)
    return jnp.einsum("bqk,bkf->bqf", attn, v), attn


if __name__ == "__main__":
    B, S, F = 2, 8, 32   # batch=2, seq=8, feature_size=32

    key = jax.random.PRNGKey(0)
    kx, kwq, kbq, kwk, kbk, kwv, kbv = jax.random.split(key, 7)

    # Deterministic synthetic parameters (uniform like PyTorch's default init
    # scale of 1/sqrt(fan_in)); shapes follow nn.Linear(feature, feature).
    bound = 1.0 / jnp.sqrt(jnp.float32(F))
    x = jax.random.normal(kx, (B, S, F), dtype=jnp.float32)
    # Stored directly as (in, out) == W.T so the kernel computes x @ W.
    wq = jax.random.uniform(kwq, (F, F), jnp.float32, -bound, bound)
    wk = jax.random.uniform(kwk, (F, F), jnp.float32, -bound, bound)
    wv = jax.random.uniform(kwv, (F, F), jnp.float32, -bound, bound)
    bq = jax.random.uniform(kbq, (1, F), jnp.float32, -bound, bound)
    bk = jax.random.uniform(kbk, (1, F), jnp.float32, -bound, bound)
    bv = jax.random.uniform(kbv, (1, F), jnp.float32, -bound, bound)

    out, attn = self_attention_layer(x, wq, bq, wk, bk, wv, bv)
    out = jax.block_until_ready(out)
    attn = jax.block_until_ready(attn)

    ref_out, ref_attn = _reference(x, wq, bq, wk, bk, wv, bv)
    assert out.shape == (B, S, F) and attn.shape == (B, S, S)
    assert jnp.allclose(out, ref_out, atol=2e-3, rtol=2e-3)
    assert jnp.allclose(attn, ref_attn, atol=2e-3, rtol=2e-3)
    # Softmax normalisation is exact now, so rows sum to 1 within fp32 eps.
    assert jnp.allclose(jnp.sum(attn, axis=-1), 1.0, atol=1e-3)

    print("KERNEL_OK")
</pallas_src>

<mosaic_0001>
module attributes {stable_mosaic.version = 11 : i64} {
  func.func @_self_attention_kernel(%arg0: i32, %arg1: memref<16x32xf32, #tpu.memory_space<vmem>>, %arg2: memref<32x384xf32, #tpu.memory_space<vmem>>, %arg3: memref<1x384xf32, #tpu.memory_space<vmem>>, %arg4: memref<16x128xf32, #tpu.memory_space<vmem>>, %arg5: memref<16x8xf32, #tpu.memory_space<vmem>>) attributes {dimension_semantics = [#tpu.dimension_semantics<parallel>], iteration_bounds = array<i64: 1>, scalar_prefetch = 0 : i64, scratch_operands = 0 : i64, tpu.core_type = #tpu.core_type<tc>, window_params = [{transform_indices = @transform_0, window_bounds = array<i64: 16, 32>}, {pipeline_mode = #tpu.pipeline_mode<synchronous>, transform_indices = @transform_1, window_bounds = array<i64: 32, 384>}, {pipeline_mode = #tpu.pipeline_mode<synchronous>, transform_indices = @transform_2, window_bounds = array<i64: 1, 384>}, {transform_indices = @transform_3, window_bounds = array<i64: 16, 128>}, {transform_indices = @transform_4, window_bounds = array<i64: 16, 8>}]} {
    %c0 = arith.constant 0 : index
    %c0_0 = arith.constant 0 : index
    %0 = vector.load %arg1[%c0, %c0_0] : memref<16x32xf32, #tpu.memory_space<vmem>>, vector<16x32xf32>
    %c0_1 = arith.constant 0 : index
    %c0_2 = arith.constant 0 : index
    %1 = vector.load %arg2[%c0_1, %c0_2] : memref<32x384xf32, #tpu.memory_space<vmem>>, vector<32x384xf32>
    %cst = arith.constant dense<0.000000e+00> : vector<16x384xf32>
    %2 = tpu.matmul %0, %1, %cst {dimension_numbers = #tpu.dot_dimension_numbers<[1], [0], [0], [1], [0, 0, 1, 1], [], []>} : vector<16x32xf32>, vector<32x384xf32>, vector<16x384xf32> -> vector<16x384xf32>
    %c0_3 = arith.constant 0 : index
    %c0_4 = arith.constant 0 : index
    %3 = vector.load %arg3[%c0_3, %c0_4] : memref<1x384xf32, #tpu.memory_space<vmem>>, vector<1x384xf32>
    %4 = vector.broadcast %3 : vector<1x384xf32> to vector<16x384xf32>
    %5 = arith.addf %2, %4 : vector<16x384xf32>
    %6 = vector.extract_strided_slice %5 {offsets = [0, 0], sizes = [16, 128], strides = [1, 1]} : vector<16x384xf32> to vector<16x128xf32>
    %7 = vector.extract_strided_slice %5 {offsets = [0, 128], sizes = [16, 128], strides = [1, 1]} : vector<16x384xf32> to vector<16x128xf32>
    %8 = vector.extract_strided_slice %5 {offsets = [0, 256], sizes = [16, 128], strides = [1, 1]} : vector<16x384xf32> to vector<16x128xf32>
    %9 = vector.extract_strided_slice %6 {offsets = [0, 0], sizes = [8, 128], strides = [1, 1]} : vector<16x128xf32> to vector<8x128xf32>
    %10 = vector.extract_strided_slice %7 {offsets = [0, 0], sizes = [8, 128], strides = [1, 1]} : vector<16x128xf32> to vector<8x128xf32>
    %11 = vector.extract_strided_slice %8 {offsets = [0, 0], sizes = [8, 128], strides = [1, 1]} : vector<16x128xf32> to vector<8x128xf32>
    %cst_5 = arith.constant dense<0.000000e+00> : vector<8x8xf32>
    %12 = tpu.matmul %9, %10, %cst_5 {dimension_numbers = #tpu.dot_dimension_numbers<[1], [1], [0], [0], [0, 0, 1, 0], [], []>} : vector<8x128xf32>, vector<8x128xf32>, vector<8x8xf32> -> vector<8x8xf32>
    %cst_6 = arith.constant dense<0xFF800000> : vector<8xf32>
    %13 = vector.multi_reduction <maximumf>, %12, %cst_6 [1] : vector<8x8xf32> to vector<8xf32>
    %14 = vector.shape_cast %13 : vector<8xf32> to vector<8x1xf32>
    %15 = vector.broadcast %14 : vector<8x1xf32> to vector<8x8xf32>
    %16 = arith.subf %12, %15 : vector<8x8xf32>
    %17 = math.exp %16 : vector<8x8xf32>
    %cst_7 = arith.constant dense<0.000000e+00> : vector<8xf32>
    %18 = vector.multi_reduction <add>, %17, %cst_7 [1] : vector<8x8xf32> to vector<8xf32>
    %19 = vector.shape_cast %18 : vector<8xf32> to vector<8x1xf32>
    %cst_8 = arith.constant 1.000000e+00 : f32
    %20 = vector.broadcast %cst_8 : f32 to vector<8x1xf32>
    %21 = arith.divf %20, %19 : vector<8x1xf32>
    %22 = vector.broadcast %21 : vector<8x1xf32> to vector<8x8xf32>
    %23 = arith.mulf %17, %22 : vector<8x8xf32>
    %cst_9 = arith.constant dense<0.000000e+00> : vector<8x128xf32>
    %24 = tpu.matmul %23, %11, %cst_9 {dimension_numbers = #tpu.dot_dimension_numbers<[1], [0], [0], [1], [0, 0, 1, 1], [], []>} : vector<8x8xf32>, vector<8x128xf32>, vector<8x128xf32> -> vector<8x128xf32>
    %c0_10 = arith.constant 0 : index
    %c0_11 = arith.constant 0 : index
    %25 = vector.load %arg4[%c0_10, %c0_11] : memref<16x128xf32, #tpu.memory_space<vmem>>, vector<8x128xf32>
    tpu.vector_store %arg4[%c0_10, %c0_11], %24 {strides = array<i32>} : memref<16x128xf32, #tpu.memory_space<vmem>>, vector<8x128xf32>,
    %c0_12 = arith.constant 0 : index
    %c0_13 = arith.constant 0 : index
    %26 = vector.load %arg5[%c0_12, %c0_13] : memref<16x8xf32, #tpu.memory_space<vmem>>, vector<8x8xf32>
    tpu.vector_store %arg5[%c0_12, %c0_13], %23 {strides = array<i32>} : memref<16x8xf32, #tpu.memory_space<vmem>>, vector<8x8xf32>,
    %27 = vector.extract_strided_slice %6 {offsets = [8, 0], sizes = [8, 128], strides = [1, 1]} : vector<16x128xf32> to vector<8x128xf32>
    %28 = vector.extract_strided_slice %7 {offsets = [8, 0], sizes = [8, 128], strides = [1, 1]} : vector<16x128xf32> to vector<8x128xf32>
    %29 = vector.extract_strided_slice %8 {offsets = [8, 0], sizes = [8, 128], strides = [1, 1]} : vector<16x128xf32> to vector<8x128xf32>
    %cst_14 = arith.constant dense<0.000000e+00> : vector<8x8xf32>
    %30 = tpu.matmul %27, %28, %cst_14 {dimension_numbers = #tpu.dot_dimension_numbers<[1], [1], [0], [0], [0, 0, 1, 0], [], []>} : vector<8x128xf32>, vector<8x128xf32>, vector<8x8xf32> -> vector<8x8xf32>
    %cst_15 = arith.constant dense<0xFF800000> : vector<8xf32>
    %31 = vector.multi_reduction <maximumf>, %30, %cst_15 [1] : vector<8x8xf32> to vector<8xf32>
    %32 = vector.shape_cast %31 : vector<8xf32> to vector<8x1xf32>
    %33 = vector.broadcast %32 : vector<8x1xf32> to vector<8x8xf32>
    %34 = arith.subf %30, %33 : vector<8x8xf32>
    %35 = math.exp %34 : vector<8x8xf32>
    %cst_16 = arith.constant dense<0.000000e+00> : vector<8xf32>
    %36 = vector.multi_reduction <add>, %35, %cst_16 [1] : vector<8x8xf32> to vector<8xf32>
    %37 = vector.shape_cast %36 : vector<8xf32> to vector<8x1xf32>
    %cst_17 = arith.constant 1.000000e+00 : f32
    %38 = vector.broadcast %cst_17 : f32 to vector<8x1xf32>
    %39 = arith.divf %38, %37 : vector<8x1xf32>
    %40 = vector.broadcast %39 : vector<8x1xf32> to vector<8x8xf32>
    %41 = arith.mulf %35, %40 : vector<8x8xf32>
    %cst_18 = arith.constant dense<0.000000e+00> : vector<8x128xf32>
    %42 = tpu.matmul %41, %29, %cst_18 {dimension_numbers = #tpu.dot_dimension_numbers<[1], [0], [0], [1], [0, 0, 1, 1], [], []>} : vector<8x8xf32>, vector<8x128xf32>, vector<8x128xf32> -> vector<8x128xf32>
    %c8 = arith.constant 8 : index
    %c0_19 = arith.constant 0 : index
    %43 = vector.load %arg4[%c8, %c0_19] : memref<16x128xf32, #tpu.memory_space<vmem>>, vector<8x128xf32>
    tpu.vector_store %arg4[%c8, %c0_19], %42 {strides = array<i32>} : memref<16x128xf32, #tpu.memory_space<vmem>>, vector<8x128xf32>,
    %c8_20 = arith.constant 8 : index
    %c0_21 = arith.constant 0 : index
    %44 = vector.load %arg5[%c8_20, %c0_21] : memref<16x8xf32, #tpu.memory_space<vmem>>, vector<8x8xf32>
    tpu.vector_store %arg5[%c8_20, %c0_21], %41 {strides = array<i32>} : memref<16x8xf32, #tpu.memory_space<vmem>>, vector<8x8xf32>,
    return
  }
  func.func @transform_0(%arg0: i32) -> (i32, i32) {
    %c0_i32 = arith.constant 0 : i32
    %c0_i32_0 = arith.constant 0 : i32
    return %arg0, %c0_i32 : i32, i32
  }
  func.func @transform_1(%arg0: i32) -> (i32, i32) {
    %c0_i32 = arith.constant 0 : i32
    %c0_i32_0 = arith.constant 0 : i32
    %c0_i32_1 = arith.constant 0 : i32
    return %c0_i32, %c0_i32_0 : i32, i32
  }
  func.func @transform_2(%arg0: i32) -> (i32, i32) {
    %c0_i32 = arith.constant 0 : i32
    %c0_i32_0 = arith.constant 0 : i32
    %c0_i32_1 = arith.constant 0 : i32
    return %c0_i32, %c0_i32_0 : i32, i32
  }
  func.func @transform_3(%arg0: i32) -> (i32, i32) {
    %c0_i32 = arith.constant 0 : i32
    %c0_i32_0 = arith.constant 0 : i32
    return %arg0, %c0_i32 : i32, i32
  }
  func.func @transform_4(%arg0: i32) -> (i32, i32) {
    %c0_i32 = arith.constant 0 : i32
    %c0_i32_0 = arith.constant 0 : i32
    return %arg0, %c0_i32 : i32, i32
  }
}

</mosaic_0001>

<llo_original>
// kernel: tpu_custom_call.1
$region0: #{tpu_custom_call.1}
  #allocation0 [shape = 'u32[]', space=smem, size = 0x4, offset = 0x4, fixed_abs, tag = 'smem constant byte address 0x4 - core index']
  #allocation1 [shape = 'u32[144,128]{1,0:T(1,128)}', space=vmem, size = 0x12000, scoped, tag = 'internal scratch']
  %s0 = inlined_call_operand.hbm [shape: f32[16,32], index: 0, kind: input, shape index: {}]
  %s1 = inlined_call_operand.hbm [shape: f32[32,384], index: 1, kind: input, shape index: {}]
  %s2 = inlined_call_operand.vmem [shape: f32[1,384], index: 2, kind: input, shape index: {}]
  %s3 = inlined_call_operand.hbm [shape: f32[16,128], index: 3, kind: output, shape index: {0}]
  %s4 = inlined_call_operand.vmem [shape: f32[16,8], index: 4, kind: output, shape index: {1}]
  %5 = xla_tuple %s3, %s4
  %s6 = sld [smem:[#allocation0]]
  $region38: #{tpu_custom_call.1} parent=0
    _
  %s8 = ssub.s32 1, %s6
  %s9 = scalar_select 0, %s8, %s6
  $region1: #{tpu_custom_call.1} parent=0
    #allocation2 [shape = 'u8[8192]{0}', space=vmem, size = 0x2000, scoped, tag = 'input window, operand 0, single buffered']
    #allocation3 [shape = 's32[1]{0}', space=sflag, size = 0x4, scoped, tag = 'scoped memory for tpu_custom_call.1']
    #allocation4 [shape = 's32[1]{0}', space=sflag, size = 0x4, scoped, tag = 'scoped memory for tpu_custom_call.1']
    #allocation5 [shape = 'u8[49152]{0}', space=vmem, size = 0xc000, scoped, tag = 'input window, operand 1, single buffered']
    #allocation6 [shape = 's32[1]{0}', space=sflag, size = 0x4, scoped, tag = 'scoped memory for tpu_custom_call.1']
    #allocation7 [shape = 'u8[8192]{0}', space=vmem, size = 0x2000, scoped, tag = 'output window, operand 0, single buffered']
    %10 = vsyncpa [#allocation3], 0
    %11 = vsyncpa [#allocation6], 0
    %12 = vsyncpa [#allocation4], 0
    // Predicated region
    $region2: #{tpu_custom_call.1} parent=1 // pred_check
      _
    $region3: #{tpu_custom_call.1} parent=1 // pred_check_branch
      %14 = sbr.rel (0) target = $region5
    $region4: #{tpu_custom_call.1} parent=1 // pred_region
      %s16 = ssub.s32 256, 256
      %17 = vsyncadd [#allocation3], %s16
      %s18 = sshll.u32 [#allocation2], 4
      %s19 = int_to_ptr.vmem [resolvable:$true] %s18
      %24 = dma.hbm_to_vmem [thread:$0]  %s0, 256, %s19, [#allocation3], 128, 128, 8
    $region5: #{tpu_custom_call.1} parent=1 // pred_fallthru
      _
    // Predicated region
    $region6: #{tpu_custom_call.1} parent=1 // pred_check
      _
    $region7: #{tpu_custom_call.1} parent=1 // pred_check_branch
      %26 = sbr.rel (0) target = $region9
    $region8: #{tpu_custom_call.1} parent=1 // pred_region
      %s28 = ssub.s32 1536, 1536
      %29 = vsyncadd [#allocation6], %s28
      %s30 = sshll.u32 [#allocation5], 4
      %s31 = int_to_ptr.vmem [resolvable:$true] %s30
      %36 = dma.hbm_to_vmem [thread:$0]  %s1, 1536, %s31, [#allocation6], 384, 384, 24
    $region9: #{tpu_custom_call.1} parent=1 // pred_fallthru
      _
    // Predicated region
    $region10: #{tpu_custom_call.1} parent=1 // pred_check
      _
    $region11: #{tpu_custom_call.1} parent=1 // pred_check_branch
      %38 = sbr.rel (0) target = $region13
    $region12: #{tpu_custom_call.1} parent=1 // pred_region
      _
    $region13: #{tpu_custom_call.1} parent=1 // pred_fallthru
      _
    // Predicated region
    $region14: #{tpu_custom_call.1} parent=1 // pred_check
      _
    $region15: #{tpu_custom_call.1} parent=1 // pred_check_branch
      %40 = sbr.rel (0) target = $region17
    $region16: #{tpu_custom_call.1} parent=1 // pred_region
      %41 = dma.done [#allocation3], 256
    $region17: #{tpu_custom_call.1} parent=1 // pred_fallthru
      _
    // Predicated region
    $region18: #{tpu_custom_call.1} parent=1 // pred_check
      _
    $region19: #{tpu_custom_call.1} parent=1 // pred_check_branch
      %43 = sbr.rel (0) target = $region21
    $region20: #{tpu_custom_call.1} parent=1 // pred_region
      %44 = dma.done [#allocation6], 1536
    $region21: #{tpu_custom_call.1} parent=1 // pred_fallthru
      _
    %v45 = vld [vmem:[#allocation2] sm:$0xff]
    %v46 = vld [vmem:[#allocation2 + $0x8] sm:$0xff]
    %v47 = vld [vmem:[#allocation5] sm:$0xff]
    %v48 = vld [vmem:[#allocation5 + $0x8] sm:$0xff]
    %v49 = vld [vmem:[#allocation5 + $0x10] sm:$0xff]
    %v50 = vld [vmem:[#allocation5 + $0x18] sm:$0xff]
    %v51 = vld [vmem:[#allocation5 + $0x20] sm:$0xff]
    %v52 = vld [vmem:[#allocation5 + $0x28] sm:$0xff]
    %v53 = vld [vmem:[#allocation5 + $0x30] sm:$0xff]
    %v54 = vld [vmem:[#allocation5 + $0x38] sm:$0xff]
    %v55 = vld [vmem:[#allocation5 + $0x40] sm:$0xff]
    %v56 = vld [vmem:[#allocation5 + $0x48] sm:$0xff]
    %v57 = vld [vmem:[#allocation5 + $0x50] sm:$0xff]
    %v58 = vld [vmem:[#allocation5 + $0x58] sm:$0xff]
    %v59 = vld [vmem:[%s2] sm:$0x7]
    %v61 = vlaneseq
    %v62 = vshrl.u32 %v61, 7
    %v63 = vsub.s32 0, %v62
    %v64 = vrot.slane %v59, %v63
    %v65 = vlaneseq
    %v66 = vshrl.u32 %v65, 7
    %v67 = vsub.s32 1, %v66
    %v68 = vrot.slane %v59, %v67
    %v69 = vlaneseq
    %v70 = vshrl.u32 %v69, 7
    %v71 = vsub.s32 2, %v70
    %v72 = vrot.slane %v59, %v71
    %vm76 = vcmask 261120
    %v78 = vsel %vm76, %v45, 0
    %v81 = vsel %vm76, %v46, 0
    %83 = vmatprep.subr.mxu0 %v48
    %84 = vmatpush1.msra.mxu0 %v47
    %85 = vmatprep.subr.mxu0 %v51
    %86 = vmatpush1.msra.mxu0 %v50
    %87 = vmatprep.subr.mxu0 %v54
    %88 = vmatpush1.msra.mxu0 %v53
    %89 = vmatprep.subr.mxu0 %v57
    %90 = vmatpush1.msra.mxu0 %v56
    %91 = vmatprep.subr.mxu0 0.0
    %92 = vmatpush1.msra.mxu0 0.0
    %93 = vmatprep.subr.mxu0 0.0
    %94 = vmatpush1.msra.mxu0 0.0
    %95 = vmatprep.subr.mxu0 0.0
    %96 = vmatpush1.msra.mxu0 0.0
    %97 = vmatprep.subr.mxu0 0.0
    %98 = vmatpush1.msra.mxu0 0.0
    %99 = vmatprep.subr.mxu0 0.0
    %100 = vmatpush1.msra.mxu0 0.0
    %101 = vmatprep.subr.mxu0 0.0
    %102 = vmatpush1.msra.mxu0 0.0
    %103 = vmatprep.subr.mxu0 0.0
    %104 = vmatpush1.msra.mxu0 0.0
    %105 = vmatprep.subr.mxu0 0.0
    %106 = vmatpush1.msra.mxu0 0.0
    %107 = vmatprep.subr.mxu0 0.0
    %108 = vmatpush1.msra.mxu0 0.0
    %109 = vmatprep.subr.mxu0 0.0
    %110 = vmatpush1.msra.mxu0 0.0
    %111 = vmatprep.subr.mxu0 0.0
    %112 = vmatpush1.msra.mxu0 0.0
    %113 = vmatprep.subr.mxu0 0.0
    %114 = vmatpush1.msra.mxu0 0.0
    %115 = vmatprep.subr.mxu0 0.0
    %116 = vmatpush1.msra.mxu0 0.0
    %117 = vmatprep.subr.mxu0 0.0
    %118 = vmatpush1.msra.mxu0 0.0
    %119 = vmatprep.subr.mxu0 0.0
    %120 = vmatpush1.msra.mxu0 0.0
    %121 = vmatprep.subr.mxu0 0.0
    %122 = vmatpush1.msra.mxu0 0.0
    %123 = vmatprep.subr.mxu0 0.0
    %124 = vmatpush1.msra.mxu0 0.0
    %125 = vmatprep.subr.mxu0 0.0
    %126 = vmatpush1.msra.mxu0 0.0
    %127 = vmatprep.subr.mxu0 0.0
    %128 = vmatpush1.msra.mxu0 0.0
    %129 = vmatprep.subr.mxu0 0.0
    %130 = vmatpush1.msra.mxu0 0.0
    %131 = vmatprep.subr.mxu0 0.0
    %132 = vmatpush1.msra.mxu0 0.0
    %133 = vmatprep.subr.mxu0 0.0
    %134 = vmatpush1.msra.mxu0 0.0
    %135 = vmatprep.subr.mxu0 0.0
    %136 = vmatpush1.msra.mxu0 0.0
    %137 = vmatprep.subr.mxu0 0.0
    %138 = vmatpush1.msra.mxu0 0.0
    %139 = vmatprep.subr.mxu0 0.0
    %140 = vmatpush1.msra.mxu0 0.0
    %141 = vmatprep.subr.mxu0 0.0
    %142 = vmatpush1.msra.mxu0 0.0
    %143 = vmatprep.subr.mxu0 0.0
    %144 = vmatpush1.msra.mxu0 0.0
    %145 = vmatprep.subr.mxu0 0.0
    %146 = vmatpush1.msra.mxu0 0.0
    %147 = vmatprep.mubr.f32.mxu0 0.0
    %148 = vmatmul.mubr.f32.gmra.mrb[0].mxu0 %v78
    %v149 = vpop.f32.mrb[0].mxu0
    %v150 = vadd.f32 %v64, %v149
    %v151 = vpop.f32.mrb[0].mxu0
    %v152 = vadd.f32 %v68, %v151
    %153 = vmatprep.mubr.f32.mxu0 0.0
    %154 = vmatmul.mubr.f32.gmra.mrb[0].mxu0 %v81
    %v155 = vpop.f32.mrb[0].mxu0
    %v156 = vadd.f32 %v64, %v155
    %v157 = vpop.f32.mrb[0].mxu0
    %v158 = vadd.f32 %v68, %v157
    %159 = vdwg.mxu0
    %160 = vmatprep.subr.mxu0 0.0
    %161 = vmatpush1.msra.mxu0 %v49
    %162 = vmatprep.subr.mxu0 0.0
    %163 = vmatpush1.msra.mxu0 %v52
    %164 = vmatprep.subr.mxu0 0.0
    %165 = vmatpush1.msra.mxu0 %v55
    %166 = vmatprep.subr.mxu0 0.0
    %167 = vmatpush1.msra.mxu0 %v58
    %168 = vmatprep.subr.mxu0 0.0
    %169 = vmatpush1.msra.mxu0 0.0
    %170 = vmatprep.subr.mxu0 0.0
    %171 = vmatpush1.msra.mxu0 0.0
    %172 = vmatprep.subr.mxu0 0.0
    %173 = vmatpush1.msra.mxu0 0.0
    %174 = vmatprep.subr.mxu0 0.0
    %175 = vmatpush1.msra.mxu0 0.0
    %176 = vmatprep.subr.mxu0 0.0
    %177 = vmatpush1.msra.mxu0 0.0
    %178 = vmatprep.subr.mxu0 0.0
    %179 = vmatpush1.msra.mxu0 0.0
    %180 = vmatprep.subr.mxu0 0.0
    %181 = vmatpush1.msra.mxu0 0.0
    %182 = vmatprep.subr.mxu0 0.0
    %183 = vmatpush1.msra.mxu0 0.0
    %184 = vmatprep.subr.mxu0 0.0
    %185 = vmatpush1.msra.mxu0 0.0
    %186 = vmatprep.subr.mxu0 0.0
    %187 = vmatpush1.msra.mxu0 0.0
    %188 = vmatprep.subr.mxu0 0.0
    %189 = vmatpush1.msra.mxu0 0.0
    %190 = vmatprep.subr.mxu0 0.0
    %191 = vmatpush1.msra.mxu0 0.0
    %192 = vmatprep.subr.mxu0 0.0
    %193 = vmatpush1.msra.mxu0 0.0
    %194 = vmatprep.subr.mxu0 0.0
    %195 = vmatpush1.msra.mxu0 0.0
    %196 = vmatprep.subr.mxu0 0.0
    %197 = vmatpush1.msra.mxu0 0.0
    %198 = vmatprep.subr.mxu0 0.0
    %199 = vmatpush1.msra.mxu0 0.0
    %200 = vmatprep.subr.mxu0 0.0
    %201 = vmatpush1.msra.mxu0 0.0
    %202 = vmatprep.subr.mxu0 0.0
    %203 = vmatpush1.msra.mxu0 0.0
    %204 = vmatprep.subr.mxu0 0.0
    %205 = vmatpush1.msra.mxu0 0.0
    %206 = vmatprep.subr.mxu0 0.0
    %207 = vmatpush1.msra.mxu0 0.0
    %208 = vmatprep.subr.mxu0 0.0
    %209 = vmatpush1.msra.mxu0 0.0
    %210 = vmatprep.subr.mxu0 0.0
    %211 = vmatpush1.msra.mxu0 0.0
    %212 = vmatprep.subr.mxu0 0.0
    %213 = vmatpush1.msra.mxu0 0.0
    %214 = vmatprep.subr.mxu0 0.0
    %215 = vmatpush1.msra.mxu0 0.0
    %216 = vmatprep.subr.mxu0 0.0
    %217 = vmatpush1.msra.mxu0 0.0
    %218 = vmatprep.subr.mxu0 0.0
    %219 = vmatpush1.msra.mxu0 0.0
    %220 = vmatprep.subr.mxu0 0.0
    %221 = vmatpush1.msra.mxu0 0.0
    %222 = vmatprep.subr.mxu0 0.0
    %223 = vmatpush1.msra.mxu0 0.0
    %224 = vmatprep.mubr.f32.mxu0 0.0
    %225 = vmatmul.mubr.f32.gmra.mrb[0].mxu0 %v78
    %v226 = vpop.f32.mrb[0].mxu0
    %v227 = vadd.f32 %v72, %v226
    %v228 = vpop.f32.mrb[0].mxu0
    %229 = vmatprep.mubr.f32.mxu0 0.0
    %230 = vmatmul.mubr.f32.gmra.mrb[0].mxu0 %v81
    %v231 = vpop.f32.mrb[0].mxu0
    %v232 = vadd.f32 %v72, %v231
    %v233 = vpop.f32.mrb[0].mxu0
    %234 = vdwg.mxu0
    %235 = vmatprep.subr.mxu0 0.0
    %236 = vmatpush1.xpose.msra.mxu0 %v152
    %237 = vmatprep.subr.mxu0 0.0
    %238 = vmatpush1.xpose.msra.mxu0 0.0
    %239 = vmatprep.subr.mxu0 0.0
    %240 = vmatpush1.xpose.msra.mxu0 0.0
    %241 = vmatprep.subr.mxu0 0.0
    %242 = vmatpush1.xpose.msra.mxu0 0.0
    %243 = vmatprep.subr.mxu0 0.0
    %244 = vmatpush1.xpose.msra.mxu0 0.0
    %245 = vmatprep.subr.mxu0 0.0
    %246 = vmatpush1.xpose.msra.mxu0 0.0
    %247 = vmatprep.subr.mxu0 0.0
    %248 = vmatpush1.xpose.msra.mxu0 0.0
    %249 = vmatprep.subr.mxu0 0.0
    %250 = vmatpush1.xpose.msra.mxu0 0.0
    %251 = vmatprep.subr.mxu0 0.0
    %252 = vmatpush1.xpose.msra.mxu0 0.0
    %253 = vmatprep.subr.mxu0 0.0
    %254 = vmatpush1.xpose.msra.mxu0 0.0
    %255 = vmatprep.subr.mxu0 0.0
    %256 = vmatpush1.xpose.msra.mxu0 0.0
    %257 = vmatprep.subr.mxu0 0.0
    %258 = vmatpush1.xpose.msra.mxu0 0.0
    %259 = vmatprep.subr.mxu0 0.0
    %260 = vmatpush1.xpose.msra.mxu0 0.0
    %261 = vmatprep.subr.mxu0 0.0
    %262 = vmatpush1.xpose.msra.mxu0 0.0
    %263 = vmatprep.subr.mxu0 0.0
    %264 = vmatpush1.xpose.msra.mxu0 0.0
    %265 = vmatprep.subr.mxu0 0.0
    %266 = vmatpush1.xpose.msra.mxu0 0.0
    %267 = vmatprep.subr.mxu0 0.0
    %268 = vmatpush1.xpose.msra.mxu0 0.0
    %269 = vmatprep.subr.mxu0 0.0
    %270 = vmatpush1.xpose.msra.mxu0 0.0
    %271 = vmatprep.subr.mxu0 0.0
    %272 = vmatpush1.xpose.msra.mxu0 0.0
    %273 = vmatprep.subr.mxu0 0.0
    %274 = vmatpush1.xpose.msra.mxu0 0.0
    %275 = vmatprep.subr.mxu0 0.0
    %276 = vmatpush1.xpose.msra.mxu0 0.0
    %277 = vmatprep.subr.mxu0 0.0
    %278 = vmatpush1.xpose.msra.mxu0 0.0
    %279 = vmatprep.subr.mxu0 0.0
    %280 = vmatpush1.xpose.msra.mxu0 0.0
    %281 = vmatprep.subr.mxu0 0.0
    %282 = vmatpush1.xpose.msra.mxu0 0.0
    %283 = vmatprep.subr.mxu0 0.0
    %284 = vmatpush1.xpose.msra.mxu0 0.0
    %285 = vmatprep.subr.mxu0 0.0
    %286 = vmatpush1.xpose.msra.mxu0 0.0
    %287 = vmatprep.subr.mxu0 0.0
    %288 = vmatpush1.xpose.msra.mxu0 0.0
    %289 = vmatprep.subr.mxu0 0.0
    %290 = vmatpush1.xpose.msra.mxu0 0.0
    %291 = vmatprep.subr.mxu0 0.0
    %292 = vmatpush1.xpose.msra.mxu0 0.0
    %293 = vmatprep.subr.mxu0 0.0
    %294 = vmatpush1.xpose.msra.mxu0 0.0
    %295 = vmatprep.subr.mxu0 0.0
    %296 = vmatpush1.xpose.msra.mxu0 0.0
    %297 = vmatprep.subr.mxu0 0.0
    %298 = vmatpush1.xpose.msra.mxu0 0.0
    %299 = vmatprep.mubr.f32.mxu0 0.0
    %300 = vmatmul.mubr.f32.gmra.mrb[0].mxu0 %v150
    %v301 = vpop.f32.mrb[0].mxu0
    %v302 = vadd.f32 0.0, %v301
    %v303 = vpop.f32.mrb[0].mxu0
    %304 = vdwg.mxu0
    %vm305 = vcmask 64512
    %v306 = vsel %vm305, %v302, -inf
    %307 = vmax.xlane.f32.xlu0 %v306
    %v308 = vpop.xlane.xlu0 %307
    %v309 = vsub.f32 %v302, %v308
    %v310 = vmul.f32 %v309, 1.442695
    %v311 = vpow.pop %v310
    %v312 = vsel %vm305, %v311, 0.0
    %313 = vadd.xlane.f32.xlu0 %v312
    %v314 = vpop.xlane.xlu0 %313
    %v315 = vrcp.pop %v314
    %v316 = vmul.f32 1.0, %v315
    %v317 = vmul.f32 %v311, %v316
    %v319 = vsel %vm305, %v317, 0
    %321 = vmatprep.subr.mxu0 0.0
    %322 = vmatpush1.msra.mxu0 %v227
    %323 = vmatprep.subr.mxu0 0.0
    %324 = vmatpush1.msra.mxu0 0.0
    %325 = vmatprep.subr.mxu0 0.0
    %326 = vmatpush1.msra.mxu0 0.0
    %327 = vmatprep.subr.mxu0 0.0
    %328 = vmatpush1.msra.mxu0 0.0
    %329 = vmatprep.subr.mxu0 0.0
    %330 = vmatpush1.msra.mxu0 0.0
    %331 = vmatprep.subr.mxu0 0.0
    %332 = vmatpush1.msra.mxu0 0.0
    %333 = vmatprep.subr.mxu0 0.0
    %334 = vmatpush1.msra.mxu0 0.0
    %335 = vmatprep.subr.mxu0 0.0
    %336 = vmatpush1.msra.mxu0 0.0
    %337 = vmatprep.subr.mxu0 0.0
    %338 = vmatpush1.msra.mxu0 0.0
    %339 = vmatprep.subr.mxu0 0.0
    %340 = vmatpush1.msra.mxu0 0.0
    %341 = vmatprep.subr.mxu0 0.0
    %342 = vmatpush1.msra.mxu0 0.0
    %343 = vmatprep.subr.mxu0 0.0
    %344 = vmatpush1.msra.mxu0 0.0
    %345 = vmatprep.subr.mxu0 0.0
    %346 = vmatpush1.msra.mxu0 0.0
    %347 = vmatprep.subr.mxu0 0.0
    %348 = vmatpush1.msra.mxu0 0.0
    %349 = vmatprep.subr.mxu0 0.0
    %350 = vmatpush1.msra.mxu0 0.0
    %351 = vmatprep.subr.mxu0 0.0
    %352 = vmatpush1.msra.mxu0 0.0
    %353 = vmatprep.subr.mxu0 0.0
    %354 = vmatpush1.msra.mxu0 0.0
    %355 = vmatprep.subr.mxu0 0.0
    %356 = vmatpush1.msra.mxu0 0.0
    %357 = vmatprep.subr.mxu0 0.0
    %358 = vmatpush1.msra.mxu0 0.0
    %359 = vmatprep.subr.mxu0 0.0
    %360 = vmatpush1.msra.mxu0 0.0
    %361 = vmatprep.subr.mxu0 0.0
    %362 = vmatpush1.msra.mxu0 0.0
    %363 = vmatprep.subr.mxu0 0.0
    %364 = vmatpush1.msra.mxu0 0.0
    %365 = vmatprep.subr.mxu0 0.0
    %366 = vmatpush1.msra.mxu0 0.0
    %367 = vmatprep.subr.mxu0 0.0
    %368 = vmatpush1.msra.mxu0 0.0
    %369 = vmatprep.subr.mxu0 0.0
    %370 = vmatpush1.msra.mxu0 0.0
    %371 = vmatprep.subr.mxu0 0.0
    %372 = vmatpush1.msra.mxu0 0.0
    %373 = vmatprep.subr.mxu0 0.0
    %374 = vmatpush1.msra.mxu0 0.0
    %375 = vmatprep.subr.mxu0 0.0
    %376 = vmatpush1.msra.mxu0 0.0
    %377 = vmatprep.subr.mxu0 0.0
    %378 = vmatpush1.msra.mxu0 0.0
    %379 = vmatprep.subr.mxu0 0.0
    %380 = vmatpush1.msra.mxu0 0.0
    %381 = vmatprep.subr.mxu0 0.0
    %382 = vmatpush1.msra.mxu0 0.0
    %383 = vmatprep.subr.mxu0 0.0
    %384 = vmatpush1.msra.mxu0 0.0
    %385 = vmatprep.mubr.f32.mxu0 0.0
    %386 = vmatmul.mubr.f32.gmra.mrb[0].mxu0 %v319
    %v387 = vpop.f32.mrb[0].mxu0
    %v388 = vadd.f32 0.0, %v387
    %v389 = vpop.f32.mrb[0].mxu0
    %390 = vdwg.mxu0
    %391 = vst [vmem:[#allocation7] sm:$0xff] %v388
    %392 = vst.msk [vmem:[%s4] sm:$0xff] %vm305, %v317
    %393 = vmatprep.subr.mxu0 0.0
    %394 = vmatpush1.xpose.msra.mxu0 %v158
    %395 = vmatprep.subr.mxu0 0.0
    %396 = vmatpush1.xpose.msra.mxu0 0.0
    %397 = vmatprep.subr.mxu0 0.0
    %398 = vmatpush1.xpose.msra.mxu0 0.0
    %399 = vmatprep.subr.mxu0 0.0
    %400 = vmatpush1.xpose.msra.mxu0 0.0
    %401 = vmatprep.subr.mxu0 0.0
    %402 = vmatpush1.xpose.msra.mxu0 0.0
    %403 = vmatprep.subr.mxu0 0.0
    %404 = vmatpush1.xpose.msra.mxu0 0.0
    %405 = vmatprep.subr.mxu0 0.0
    %406 = vmatpush1.xpose.msra.mxu0 0.0
    %407 = vmatprep.subr.mxu0 0.0
    %408 = vmatpush1.xpose.msra.mxu0 0.0
    %409 = vmatprep.subr.mxu0 0.0
    %410 = vmatpush1.xpose.msra.mxu0 0.0
    %411 = vmatprep.subr.mxu0 0.0
    %412 = vmatpush1.xpose.msra.mxu0 0.0
    %413 = vmatprep.subr.mxu0 0.0
    %414 = vmatpush1.xpose.msra.mxu0 0.0
    %415 = vmatprep.subr.mxu0 0.0
    %416 = vmatpush1.xpose.msra.mxu0 0.0
    %417 = vmatprep.subr.mxu0 0.0
    %418 = vmatpush1.xpose.msra.mxu0 0.0
    %419 = vmatprep.subr.mxu0 0.0
    %420 = vmatpush1.xpose.msra.mxu0 0.0
    %421 = vmatprep.subr.mxu0 0.0
    %422 = vmatpush1.xpose.msra.mxu0 0.0
    %423 = vmatprep.subr.mxu0 0.0
    %424 = vmatpush1.xpose.msra.mxu0 0.0
    %425 = vmatprep.subr.mxu0 0.0
    %426 = vmatpush1.xpose.msra.mxu0 0.0
    %427 = vmatprep.subr.mxu0 0.0
    %428 = vmatpush1.xpose.msra.mxu0 0.0
    %429 = vmatprep.subr.mxu0 0.0
    %430 = vmatpush1.xpose.msra.mxu0 0.0
    %431 = vmatprep.subr.mxu0 0.0
    %432 = vmatpush1.xpose.msra.mxu0 0.0
    %433 = vmatprep.subr.mxu0 0.0
    %434 = vmatpush1.xpose.msra.mxu0 0.0
    %435 = vmatprep.subr.mxu0 0.0
    %436 = vmatpush1.xpose.msra.mxu0 0.0
    %437 = vmatprep.subr.mxu0 0.0
    %438 = vmatpush1.xpose.msra.mxu0 0.0
    %439 = vmatprep.subr.mxu0 0.0
    %440 = vmatpush1.xpose.msra.mxu0 0.0
    %441 = vmatprep.subr.mxu0 0.0
    %442 = vmatpush1.xpose.msra.mxu0 0.0
    %443 = vmatprep.subr.mxu0 0.0
    %444 = vmatpush1.xpose.msra.mxu0 0.0
    %445 = vmatprep.subr.mxu0 0.0
    %446 = vmatpush1.xpose.msra.mxu0 0.0
    %447 = vmatprep.subr.mxu0 0.0
    %448 = vmatpush1.xpose.msra.mxu0 0.0
    %449 = vmatprep.subr.mxu0 0.0
    %450 = vmatpush1.xpose.msra.mxu0 0.0
    %451 = vmatprep.subr.mxu0 0.0
    %452 = vmatpush1.xpose.msra.mxu0 0.0
    %453 = vmatprep.subr.mxu0 0.0
    %454 = vmatpush1.xpose.msra.mxu0 0.0
    %455 = vmatprep.subr.mxu0 0.0
    %456 = vmatpush1.xpose.msra.mxu0 0.0
    %457 = vmatprep.mubr.f32.mxu0 0.0
    %458 = vmatmul.mubr.f32.gmra.mrb[0].mxu0 %v156
    %v459 = vpop.f32.mrb[0].mxu0
    %v460 = vadd.f32 0.0, %v459
    %v461 = vpop.f32.mrb[0].mxu0
    %462 = vdwg.mxu0
    %v463 = vsel %vm305, %v460, -inf
    %464 = vmax.xlane.f32.xlu0 %v463
    %v465 = vpop.xlane.xlu0 %464
    %v466 = vsub.f32 %v460, %v465
    %v467 = vmul.f32 %v466, 1.442695
    %v468 = vpow.pop %v467
    %v469 = vsel %vm305, %v468, 0.0
    %470 = vadd.xlane.f32.xlu0 %v469
    %v471 = vpop.xlane.xlu0 %470
    %v472 = vrcp.pop %v471
    %v473 = vmul.f32 1.0, %v472
    %v474 = vmul.f32 %v468, %v473
    %v476 = vsel %vm305, %v474, 0
    %478 = vmatprep.subr.mxu0 0.0
    %479 = vmatpush1.msra.mxu0 %v232
    %480 = vmatprep.subr.mxu0 0.0
    %481 = vmatpush1.msra.mxu0 0.0
    %482 = vmatprep.subr.mxu0 0.0
    %483 = vmatpush1.msra.mxu0 0.0
    %484 = vmatprep.subr.mxu0 0.0
    %485 = vmatpush1.msra.mxu0 0.0
    %486 = vmatprep.subr.mxu0 0.0
    %487 = vmatpush1.msra.mxu0 0.0
    %488 = vmatprep.subr.mxu0 0.0
    %489 = vmatpush1.msra.mxu0 0.0
    %490 = vmatprep.subr.mxu0 0.0
    %491 = vmatpush1.msra.mxu0 0.0
    %492 = vmatprep.subr.mxu0 0.0
    %493 = vmatpush1.msra.mxu0 0.0
    %494 = vmatprep.subr.mxu0 0.0
    %495 = vmatpush1.msra.mxu0 0.0
    %496 = vmatprep.subr.mxu0 0.0
    %497 = vmatpush1.msra.mxu0 0.0
    %498 = vmatprep.subr.mxu0 0.0
    %499 = vmatpush1.msra.mxu0 0.0
    %500 = vmatprep.subr.mxu0 0.0
    %501 = vmatpush1.msra.mxu0 0.0
    %502 = vmatprep.subr.mxu0 0.0
    %503 = vmatpush1.msra.mxu0 0.0
    %504 = vmatprep.subr.mxu0 0.0
    %505 = vmatpush1.msra.mxu0 0.0
    %506 = vmatprep.subr.mxu0 0.0
    %507 = vmatpush1.msra.mxu0 0.0
    %508 = vmatprep.subr.mxu0 0.0
    %509 = vmatpush1.msra.mxu0 0.0
    %510 = vmatprep.subr.mxu0 0.0
    %511 = vmatpush1.msra.mxu0 0.0
    %512 = vmatprep.subr.mxu0 0.0
    %513 = vmatpush1.msra.mxu0 0.0
    %514 = vmatprep.subr.mxu0 0.0
    %515 = vmatpush1.msra.mxu0 0.0
    %516 = vmatprep.subr.mxu0 0.0
    %517 = vmatpush1.msra.mxu0 0.0
    %518 = vmatprep.subr.mxu0 0.0
    %519 = vmatpush1.msra.mxu0 0.0
    %520 = vmatprep.subr.mxu0 0.0
    %521 = vmatpush1.msra.mxu0 0.0
    %522 = vmatprep.subr.mxu0 0.0
    %523 = vmatpush1.msra.mxu0 0.0
    %524 = vmatprep.subr.mxu0 0.0
    %525 = vmatpush1.msra.mxu0 0.0
    %526 = vmatprep.subr.mxu0 0.0
    %527 = vmatpush1.msra.mxu0 0.0
    %528 = vmatprep.subr.mxu0 0.0
    %529 = vmatpush1.msra.mxu0 0.0
    %530 = vmatprep.subr.mxu0 0.0
    %531 = vmatpush1.msra.mxu0 0.0
    %532 = vmatprep.subr.mxu0 0.0
    %533 = vmatpush1.msra.mxu0 0.0
    %534 = vmatprep.subr.mxu0 0.0
    %535 = vmatpush1.msra.mxu0 0.0
    %536 = vmatprep.subr.mxu0 0.0
    %537 = vmatpush1.msra.mxu0 0.0
    %538 = vmatprep.subr.mxu0 0.0
    %539 = vmatpush1.msra.mxu0 0.0
    %540 = vmatprep.subr.mxu0 0.0
    %541 = vmatpush1.msra.mxu0 0.0
    %542 = vmatprep.mubr.f32.mxu0 0.0
    %543 = vmatmul.mubr.f32.gmra.mrb[0].mxu0 %v476
    %v544 = vpop.f32.mrb[0].mxu0
    %v545 = vadd.f32 0.0, %v544
    %v546 = vpop.f32.mrb[0].mxu0
    %547 = vdwg.mxu0
    %548 = vst [vmem:[#allocation7 + $0x8] sm:$0xff] %v545
    %549 = vst.msk [vmem:[%s4 + $0x8] sm:$0xff] %vm305, %v474
    // Predicated region
    $region22: #{tpu_custom_call.1} parent=1 // pred_check
      _
    $region23: #{tpu_custom_call.1} parent=1 // pred_check_branch
      %551 = sbr.rel (0) target = $region25
    $region24: #{tpu_custom_call.1} parent=1 // pred_region
      %s553 = ssub.s32 256, 256
      %554 = vsyncadd [#allocation4], %s553
      %s555 = sshll.u32 [#allocation7], 4
      %s556 = int_to_ptr.vmem [resolvable:$true] %s555
      %561 = dma.vmem_to_hbm [thread:$0]  %s556, 256, %s3, [#allocation4], 128, 128, 8
    $region25: #{tpu_custom_call.1} parent=1 // pred_fallthru
      _
    // Predicated region
    $region26: #{tpu_custom_call.1} parent=1 // pred_check
      _
    $region27: #{tpu_custom_call.1} parent=1 // pred_check_branch
      %563 = sbr.rel (0) target = $region29
    $region28: #{tpu_custom_call.1} parent=1 // pred_region
      _
    $region29: #{tpu_custom_call.1} parent=1 // pred_fallthru
      _
    // Predicated region
    $region30: #{tpu_custom_call.1} parent=1 // pred_check
      _
    $region31: #{tpu_custom_call.1} parent=1 // pred_check_branch
      %565 = sbr.rel (0) target = $region33
    $region32: #{tpu_custom_call.1} parent=1 // pred_region
      %566 = dma.done [#allocation4], 256
    $region33: #{tpu_custom_call.1} parent=1 // pred_fallthru
      _
    // Predicated region
    $region34: #{tpu_custom_call.1} parent=1 // pred_check
      _
    $region35: #{tpu_custom_call.1} parent=1 // pred_check_branch
      %568 = sbr.rel (0) target = $region37
    $region36: #{tpu_custom_call.1} parent=1 // pred_region
      _
    $region37: #{tpu_custom_call.1} parent=1 // pred_fallthru
      _
    %569 = vsyncpa [#allocation3], 1
    %570 = vsyncpa [#allocation6], 1
    %571 = vsyncpa [#allocation4], 1

</llo_original>
